<compile_context>
chip_gen: v5e
topology: v5e:2x2
jax: 0.10.0
libtpu: 0.0.40
codegen_flags: <defaults>
</compile_context>

<pallas_src>
import functools

import jax
import jax.numpy as jnp
from jax.experimental import pallas as pl
from jax.experimental.pallas import tpu as pltpu

# ----------------------------- configuration ------------------------------
ACT_MODE = "act"     # stands in for ReadPointerAgent.ACT_MODE
READ_MODE = "read"   # stands in for ReadPointerAgent.READ_MODE

B = 2            # batch
T = 8            # image sequence length
C = 4            # image channels
H = 16
W = 16
L = 6            # instruction length (tokens)
VOCAB = 20
WORD_EMB = 32
N_LANDMARK = 6
N_THETA = 8
IMG_EMB = 32     # per-frame image embedding
RNN_H = 64       # recurrent image embedding size
TXT_EMB = 64
ACT_EMB = 32
TOTAL_EMB = RNN_H + TXT_EMB + ACT_EMB   # 160
DENSE_H = 512
NUM_ACTIONS = 4


def _block_all(shape):
    """Whole-array block for a grid=(1,) pallas_call."""
    nd = len(shape)
    return pl.BlockSpec(shape, lambda i, _nd=nd: (0,) * _nd)


def _log_softmax(y):
    m = jnp.max(y, axis=-1, keepdims=True)
    z = y - m
    return z - jnp.log(jnp.sum(jnp.exp(z), axis=-1, keepdims=True))


def _bf16(x):
    return x.astype(jnp.bfloat16)


# ------------------------- fused main-path kernel --------------------------

def _fused_forward_kernel(lens_ref,                                   # SMEM (B,) int32
                          img_ref, h0_ref, txt_ref, act_ref,
                          w_img_ref, b_img_ref, wx_ref, wh_ref, b_rnn_ref,
                          w1i_ref, w1t_ref, w1a_ref, b1_ref, w2_ref, b2_ref,
                          emb_seq_ref, h_ref, logp_ref, x_ref,
                          *, batch, seq_len, channels):
    # ---- image_module stand-in: global avg-pool + linear projection ----
    # TODO(synk): the real image_module is an injected CNN with no definition here.
    pooled = jnp.mean(img_ref[...], axis=-1)                    # [B*T, C]  f32
    # K = channels (=4) contraction done on the VPU as broadcast-FMAs (no MXU trip).
    emb = b_img_ref[...]                                        # [1, IMG_EMB]
    for c in range(channels):
        emb = emb + pooled[:, c:c + 1] * w_img_ref[c:c + 1, :]  # -> [B*T, IMG_EMB]
    emb_seq_ref[...] = emb

    # ---- recurrence input projection, hoisted over ALL timesteps (one matmul) ----
    xw = jnp.dot(_bf16(emb), wx_ref[...],
                 preferred_element_type=jnp.float32) + b_rnn_ref[...]   # [B*T, RNN_H]

    # ---- image_recurrence_module stand-in: simple tanh RNN, length-masked ----
    # Fully unrolled (T and B are tiny); only h @ Wh + tanh stays on the serial chain.
    h0 = h0_ref[...]                                            # [B, RNN_H] f32
    wh = wh_ref[...]                                            # [RNN_H, RNN_H] bf16
    h_rows = []
    for b in range(batch):
        h_b = h0[b:b + 1, :]                                    # [1, RNN_H]
        n_b = lens_ref[b]                                       # scalar length (SMEM)
        for t in range(seq_len):
            row = b * seq_len + t
            h_new = jnp.tanh(
                xw[row:row + 1, :]
                + jnp.dot(_bf16(h_b), wh, preferred_element_type=jnp.float32))
            keep = (n_b > t).astype(jnp.float32)                # freeze past valid len
            h_b = keep * h_new + (1.0 - keep) * h_b
        h_rows.append(h_b)
    h_final = jnp.concatenate(h_rows, axis=0)                   # [B, RNN_H]
    h_ref[...] = h_final      # serves as both image_emb and new hidden state

    # ---- head: torch.cat([image, text, action]) @ W1 == split matmul sum ----
    hidden = (jnp.dot(_bf16(h_final), w1i_ref[...], preferred_element_type=jnp.float32)
              + jnp.dot(_bf16(txt_ref[...]), w1t_ref[...], preferred_element_type=jnp.float32)
              + jnp.dot(_bf16(act_ref[...]), w1a_ref[...], preferred_element_type=jnp.float32)
              + b1_ref[...])
    hidden = jnp.maximum(hidden, 0.0)                           # F.relu(dense1(x))
    x_ref[...] = hidden
    logits = jnp.dot(_bf16(hidden), w2_ref[...],
                     preferred_element_type=jnp.float32) + b2_ref[...]
    logp_ref[...] = _log_softmax(logits)                        # F.log_softmax(dim=1)


def pallas_fused_forward(lens, img_flat, h0, text_emb, action_emb,
                         w_img, b_img, wx, wh, b_rnn,
                         w1i, w1t, w1a, b1, w2, b2, *, batch, seq_len):
    bt, channels, _ = img_flat.shape
    img_emb_dim = w_img.shape[1]
    rnn_h = wh.shape[0]
    dense_h = w2.shape[0]
    num_out = w2.shape[1]

    dense_in = [img_flat, h0, text_emb, action_emb,
                w_img, b_img, wx, wh, b_rnn,
                w1i, w1t, w1a, b1, w2, b2]
    in_specs = ([pl.BlockSpec(memory_space=pltpu.MemorySpace.SMEM)]  # lens: scalars
                + [_block_all(a.shape) for a in dense_in])
    out_specs = (_block_all((bt, img_emb_dim)),
                 _block_all((batch, rnn_h)),
                 _block_all((batch, num_out)),
                 _block_all((batch, dense_h)))
    out_shape = (jax.ShapeDtypeStruct((bt, img_emb_dim), jnp.float32),
                 jax.ShapeDtypeStruct((batch, rnn_h), jnp.float32),
                 jax.ShapeDtypeStruct((batch, num_out), jnp.float32),
                 jax.ShapeDtypeStruct((batch, dense_h), jnp.float32))

    kernel = functools.partial(_fused_forward_kernel,
                               batch=batch, seq_len=seq_len, channels=channels)
    return pl.pallas_call(
        kernel,
        grid=(1,),
        in_specs=in_specs,
        out_specs=out_specs,
        out_shape=out_shape,
    )(lens, *dense_in)


# --------------------- fused init (model_state is None) --------------------

def _init_text_kernel(start_ref, wemb_ref,
                      w_ang_ref, b_ang_ref, w_lm_ref, b_lm_ref,
                      w_t_we_ref, w_t_lm_ref, w_t_th_ref, b_txt_ref,
                      txt_ref):
    # angle_prediction_model.get_probs([start_images]) stand-in: pool + linear + log_softmax
    # TODO(synk): real angle_prediction_model / landmark_model / text_module are injected
    # modules with no definition in the reference file; deterministic stand-ins used.
    pooled = jnp.mean(start_ref[...], axis=-1)                              # [B, C]
    prob_theta = _log_softmax(
        jnp.dot(_bf16(pooled), w_ang_ref[...], preferred_element_type=jnp.float32)
        + b_ang_ref[...])
    # landmark_model.final_module(instructions) stand-in on mean word embedding
    wemb = wemb_ref[...]                                                    # [B, WORD_EMB]
    prob_landmark = _log_softmax(
        jnp.dot(_bf16(wemb), w_lm_ref[...], preferred_element_type=jnp.float32)
        + b_lm_ref[...])
    # text_module(instructions, prob_landmark, prob_theta) stand-in:
    # cat([wemb, prob_landmark, prob_theta]) @ W_txt realized as split matmuls, tanh.
    pre = (jnp.dot(_bf16(wemb), w_t_we_ref[...], preferred_element_type=jnp.float32)
           + jnp.dot(_bf16(prob_landmark), w_t_lm_ref[...], preferred_element_type=jnp.float32)
           + jnp.dot(_bf16(prob_theta), w_t_th_ref[...], preferred_element_type=jnp.float32)
           + b_txt_ref[...])
    txt_ref[...] = jnp.tanh(pre)


def pallas_init_text(start_flat, mean_word_emb, w_ang, b_ang, w_lm, b_lm,
                     w_t_we, w_t_lm, w_t_th, b_txt):
    bb = start_flat.shape[0]
    txt_dim = w_t_we.shape[1]
    args = (start_flat, mean_word_emb, w_ang, b_ang, w_lm, b_lm,
            w_t_we, w_t_lm, w_t_th, b_txt)
    return pl.pallas_call(
        _init_text_kernel,
        grid=(1,),
        in_specs=[_block_all(a.shape) for a in args],
        out_specs=_block_all((bb, txt_dim)),
        out_shape=jax.ShapeDtypeStruct((bb, txt_dim), jnp.float32),
    )(*args)


# ------------------------------ parameters ------------------------------

def _linear_init(key, fan_in, fan_out):
    kw, kb = jax.random.split(key)
    bound = 1.0 / jnp.sqrt(jnp.float32(fan_in))
    w = jax.random.uniform(kw, (fan_in, fan_out), jnp.float32, -bound, bound)
    b = jax.random.uniform(kb, (1, fan_out), jnp.float32, -bound, bound)
    return w, b


def init_params(key):
    keys = jax.random.split(key, 12)
    p = {}
    # image projection stays f32 (VPU path); all MXU weights stored bf16.
    p["w_img"], p["b_img"] = _linear_init(keys[0], C, IMG_EMB)
    wx, p["b_rnn"] = _linear_init(keys[1], IMG_EMB, RNN_H)
    wh, _ = _linear_init(keys[2], RNN_H, RNN_H)
    p["wx"], p["wh"] = wx.astype(jnp.bfloat16), wh.astype(jnp.bfloat16)

    w_ang, p["b_ang"] = _linear_init(keys[3], C, N_THETA)
    p["w_ang"] = w_ang.astype(jnp.bfloat16)
    p["word_emb"] = 0.1 * jax.random.normal(keys[4], (VOCAB, WORD_EMB), jnp.float32)
    w_lm, p["b_lm"] = _linear_init(keys[5], WORD_EMB, N_LANDMARK)
    p["w_lm"] = w_lm.astype(jnp.bfloat16)
    w_txt, p["b_txt"] = _linear_init(keys[6], WORD_EMB + N_LANDMARK + N_THETA, TXT_EMB)
    p["w_txt_we"] = w_txt[:WORD_EMB].astype(jnp.bfloat16)
    p["w_txt_lm"] = w_txt[WORD_EMB:WORD_EMB + N_LANDMARK].astype(jnp.bfloat16)
    p["w_txt_th"] = w_txt[WORD_EMB + N_LANDMARK:].astype(jnp.bfloat16)

    p["act_emb"] = 0.1 * jax.random.normal(keys[7], (NUM_ACTIONS, ACT_EMB), jnp.float32)

    # dense1 (total_emb_size -> 512) stored split along its input so the kernel can
    # fuse the torch.cat as a sum of partial matmuls.
    w1, p["b1"] = _linear_init(keys[8], TOTAL_EMB, DENSE_H)
    p["w1_img"] = w1[:RNN_H].astype(jnp.bfloat16)
    p["w1_txt"] = w1[RNN_H:RNN_H + TXT_EMB].astype(jnp.bfloat16)
    p["w1_act"] = w1[RNN_H + TXT_EMB:].astype(jnp.bfloat16)
    w2, p["b2"] = _linear_init(keys[9], DENSE_H, NUM_ACTIONS)          # dense2
    p["w2"] = w2.astype(jnp.bfloat16)
    w_read, p["b_read"] = _linear_init(keys[10], DENSE_H, 2)           # dense_read
    p["w_read"] = w_read.astype(jnp.bfloat16)
    return p


# ------------------------------ forward ------------------------------

def forward(params, image, image_lens, instructions, start_images, prev_action,
            mode, model_state):
    Bb, Tt, Cc, Hh, Ww = image.shape
    img_flat = image.reshape(Bb * Tt, Cc, Hh * Ww).astype(jnp.float32)   # free reshape

    if model_state is None:
        start_flat = start_images.reshape(Bb, Cc, Hh * Ww).astype(jnp.float32)
        word_emb = jnp.take(params["word_emb"], instructions, axis=0)    # [B, L, WE] glue
        mean_word_emb = jnp.mean(word_emb, axis=1)                       # [B, WE]
        text_emb = pallas_init_text(
            start_flat, mean_word_emb,
            params["w_ang"], params["b_ang"], params["w_lm"], params["b_lm"],
            params["w_txt_we"], params["w_txt_lm"], params["w_txt_th"], params["b_txt"])
        image_hidden_states = jnp.zeros((Bb, RNN_H), jnp.float32)
    else:
        text_emb, image_hidden_states = model_state

    # action_module(prev_action): embedding lookup (glue)
    action_emb = jnp.take(params["act_emb"], prev_action, axis=0)        # [B, ACT_EMB]

    if mode is None or mode == ACT_MODE:
        w2, b2 = params["w2"], params["b2"]
    elif mode == READ_MODE:
        w2, b2 = params["w_read"], params["b_read"]
    else:
        raise ValueError("invalid mode for model: %r" % mode)

    lens_i32 = image_lens.astype(jnp.int32)

    emb_seq_flat, h_final, log_prob, x = pallas_fused_forward(
        lens_i32, img_flat, image_hidden_states, text_emb, action_emb,
        params["w_img"], params["b_img"], params["wx"], params["wh"], params["b_rnn"],
        params["w1_img"], params["w1_txt"], params["w1_act"], params["b1"], w2, b2,
        batch=Bb, seq_len=Tt)

    image_emb_seq = emb_seq_flat.reshape(Bb, Tt, emb_seq_flat.shape[-1])
    # image_emb and new_image_hidden_states are the same tensor for this recurrence
    # stand-in, so the kernel writes it once and we reuse it (no duplicate output DMA).
    new_model_state = (text_emb, h_final)
    return log_prob, new_model_state, image_emb_seq, x


# ------------------------------ demo ------------------------------

if __name__ == "__main__":
    key = jax.random.PRNGKey(0)
    kp, k1, k2, k3, k4 = jax.random.split(key, 5)

    params = init_params(kp)

    image = jax.random.normal(k1, (B, T, C, H, W), jnp.float32)
    start_images = jax.random.normal(k2, (B, C, H, W), jnp.float32)
    instructions = jax.random.randint(k3, (B, L), 0, VOCAB, jnp.int32)
    prev_action = jax.random.randint(k4, (B,), 0, NUM_ACTIONS, jnp.int32)
    image_lens = jnp.array([T, T - 3], jnp.int32)

    # First (non-incremental) call: model_state=None, ACT mode.
    log_prob_act, model_state, image_emb_seq, x_act = forward(
        params, image, image_lens, instructions, start_images, prev_action,
        mode=None, model_state=None)

    # Second (incremental) call reusing model_state: READ mode.
    log_prob_read, model_state2, _, x_read = forward(
        params, image, image_lens, instructions, start_images, prev_action,
        mode=READ_MODE, model_state=model_state)

    for t in (log_prob_act, x_act, image_emb_seq, model_state[1],
              log_prob_read, x_read, model_state2[1]):
        jax.block_until_ready(t)

    assert log_prob_act.shape == (B, NUM_ACTIONS)
    assert log_prob_read.shape == (B, 2)
    assert x_act.shape == (B, DENSE_H)
    assert image_emb_seq.shape == (B, T, IMG_EMB)
    # log_softmax rows must exponentiate-and-sum to 1.
    assert bool(jnp.allclose(jnp.sum(jnp.exp(log_prob_act), axis=1), 1.0, atol=1e-3))
    assert bool(jnp.allclose(jnp.sum(jnp.exp(log_prob_read), axis=1), 1.0, atol=1e-3))
    print("KERNEL_OK")
</pallas_src>

<mosaic_0001>
module attributes {stable_mosaic.version = 11 : i64} {
  func.func @_init_text_kernel(%arg0: i32, %arg1: memref<2x4x256xf32, #tpu.memory_space<vmem>>, %arg2: memref<2x32xf32, #tpu.memory_space<vmem>>, %arg3: memref<4x8xbf16, #tpu.memory_space<vmem>>, %arg4: memref<1x8xf32, #tpu.memory_space<vmem>>, %arg5: memref<32x6xbf16, #tpu.memory_space<vmem>>, %arg6: memref<1x6xf32, #tpu.memory_space<vmem>>, %arg7: memref<32x64xbf16, #tpu.memory_space<vmem>>, %arg8: memref<6x64xbf16, #tpu.memory_space<vmem>>, %arg9: memref<8x64xbf16, #tpu.memory_space<vmem>>, %arg10: memref<1x64xf32, #tpu.memory_space<vmem>>, %arg11: memref<2x64xf32, #tpu.memory_space<vmem>>) attributes {dimension_semantics = [#tpu.dimension_semantics<arbitrary>], iteration_bounds = array<i64: 1>, scalar_prefetch = 0 : i64, scratch_operands = 0 : i64, tpu.core_type = #tpu.core_type<tc>, window_params = [{pipeline_mode = #tpu.pipeline_mode<synchronous>, transform_indices = @transform_0, window_bounds = array<i64: 2, 4, 256>}, {pipeline_mode = #tpu.pipeline_mode<synchronous>, transform_indices = @transform_1, window_bounds = array<i64: 2, 32>}, {pipeline_mode = #tpu.pipeline_mode<synchronous>, transform_indices = @transform_2, window_bounds = array<i64: 4, 8>}, {pipeline_mode = #tpu.pipeline_mode<synchronous>, transform_indices = @transform_3, window_bounds = array<i64: 1, 8>}, {pipeline_mode = #tpu.pipeline_mode<synchronous>, transform_indices = @transform_4, window_bounds = array<i64: 32, 6>}, {pipeline_mode = #tpu.pipeline_mode<synchronous>, transform_indices = @transform_5, window_bounds = array<i64: 1, 6>}, {pipeline_mode = #tpu.pipeline_mode<synchronous>, transform_indices = @transform_6, window_bounds = array<i64: 32, 64>}, {pipeline_mode = #tpu.pipeline_mode<synchronous>, transform_indices = @transform_7, window_bounds = array<i64: 6, 64>}, {pipeline_mode = #tpu.pipeline_mode<synchronous>, transform_indices = @transform_8, window_bounds = array<i64: 8, 64>}, {pipeline_mode = #tpu.pipeline_mode<synchronous>, transform_indices = @transform_9, window_bounds = array<i64: 1, 64>}, {pipeline_mode = #tpu.pipeline_mode<synchronous>, transform_indices = @transform_10, window_bounds = array<i64: 2, 64>}]} {
    %c0 = arith.constant 0 : index
    %c0_0 = arith.constant 0 : index
    %c0_1 = arith.constant 0 : index
    %0 = vector.load %arg1[%c0, %c0_0, %c0_1] : memref<2x4x256xf32, #tpu.memory_space<vmem>>, vector<2x4x256xf32>
    %cst = arith.constant dense<0.000000e+00> : vector<2x4xf32>
    %1 = vector.multi_reduction <add>, %0, %cst [2] : vector<2x4x256xf32> to vector<2x4xf32>
    %cst_2 = arith.constant 2.560000e+02 : f32
    %2 = vector.broadcast %cst_2 : f32 to vector<2x4xf32>
    %3 = arith.divf %1, %2 : vector<2x4xf32>
    %4 = arith.truncf %3 : vector<2x4xf32> to vector<2x4xbf16>
    %c0_3 = arith.constant 0 : index
    %c0_4 = arith.constant 0 : index
    %5 = vector.load %arg3[%c0_3, %c0_4] : memref<4x8xbf16, #tpu.memory_space<vmem>>, vector<4x8xbf16>
    %cst_5 = arith.constant dense<0.000000e+00> : vector<2x8xf32>
    %6 = tpu.matmul %4, %5, %cst_5 {dimension_numbers = #tpu.dot_dimension_numbers<[1], [0], [0], [1], [0, 0, 1, 1], [], []>} : vector<2x4xbf16>, vector<4x8xbf16>, vector<2x8xf32> -> vector<2x8xf32>
    %c0_6 = arith.constant 0 : index
    %c0_7 = arith.constant 0 : index
    %7 = vector.load %arg4[%c0_6, %c0_7] : memref<1x8xf32, #tpu.memory_space<vmem>>, vector<1x8xf32>
    %8 = vector.broadcast %7 : vector<1x8xf32> to vector<2x8xf32>
    %9 = arith.addf %6, %8 : vector<2x8xf32>
    %cst_8 = arith.constant dense<0xFF800000> : vector<2xf32>
    %10 = vector.multi_reduction <maximumf>, %9, %cst_8 [1] : vector<2x8xf32> to vector<2xf32>
    %11 = vector.shape_cast %10 : vector<2xf32> to vector<2x1xf32>
    %12 = vector.broadcast %11 : vector<2x1xf32> to vector<2x8xf32>
    %13 = arith.subf %9, %12 : vector<2x8xf32>
    %14 = math.exp %13 : vector<2x8xf32>
    %cst_9 = arith.constant dense<0.000000e+00> : vector<2xf32>
    %15 = vector.multi_reduction <add>, %14, %cst_9 [1] : vector<2x8xf32> to vector<2xf32>
    %16 = vector.shape_cast %15 : vector<2xf32> to vector<2x1xf32>
    %17 = math.log %16 : vector<2x1xf32>
    %18 = vector.broadcast %17 : vector<2x1xf32> to vector<2x8xf32>
    %19 = arith.subf %13, %18 : vector<2x8xf32>
    %c0_10 = arith.constant 0 : index
    %c0_11 = arith.constant 0 : index
    %20 = vector.load %arg2[%c0_10, %c0_11] : memref<2x32xf32, #tpu.memory_space<vmem>>, vector<2x32xf32>
    %21 = arith.truncf %20 : vector<2x32xf32> to vector<2x32xbf16>
    %c0_12 = arith.constant 0 : index
    %c0_13 = arith.constant 0 : index
    %22 = vector.load %arg5[%c0_12, %c0_13] : memref<32x6xbf16, #tpu.memory_space<vmem>>, vector<32x6xbf16>
    %cst_14 = arith.constant dense<0.000000e+00> : vector<2x6xf32>
    %23 = tpu.matmul %21, %22, %cst_14 {dimension_numbers = #tpu.dot_dimension_numbers<[1], [0], [0], [1], [0, 0, 1, 1], [], []>} : vector<2x32xbf16>, vector<32x6xbf16>, vector<2x6xf32> -> vector<2x6xf32>
    %c0_15 = arith.constant 0 : index
    %c0_16 = arith.constant 0 : index
    %24 = vector.load %arg6[%c0_15, %c0_16] : memref<1x6xf32, #tpu.memory_space<vmem>>, vector<1x6xf32>
    %25 = vector.broadcast %24 : vector<1x6xf32> to vector<2x6xf32>
    %26 = arith.addf %23, %25 : vector<2x6xf32>
    %cst_17 = arith.constant dense<0xFF800000> : vector<2xf32>
    %27 = vector.multi_reduction <maximumf>, %26, %cst_17 [1] : vector<2x6xf32> to vector<2xf32>
    %28 = vector.shape_cast %27 : vector<2xf32> to vector<2x1xf32>
    %29 = vector.broadcast %28 : vector<2x1xf32> to vector<2x6xf32>
    %30 = arith.subf %26, %29 : vector<2x6xf32>
    %31 = math.exp %30 : vector<2x6xf32>
    %cst_18 = arith.constant dense<0.000000e+00> : vector<2xf32>
    %32 = vector.multi_reduction <add>, %31, %cst_18 [1] : vector<2x6xf32> to vector<2xf32>
    %33 = vector.shape_cast %32 : vector<2xf32> to vector<2x1xf32>
    %34 = math.log %33 : vector<2x1xf32>
    %35 = vector.broadcast %34 : vector<2x1xf32> to vector<2x6xf32>
    %36 = arith.subf %30, %35 : vector<2x6xf32>
    %37 = arith.truncf %20 : vector<2x32xf32> to vector<2x32xbf16>
    %c0_19 = arith.constant 0 : index
    %c0_20 = arith.constant 0 : index
    %38 = vector.load %arg7[%c0_19, %c0_20] : memref<32x64xbf16, #tpu.memory_space<vmem>>, vector<32x64xbf16>
    %cst_21 = arith.constant dense<0.000000e+00> : vector<2x64xf32>
    %39 = tpu.matmul %37, %38, %cst_21 {dimension_numbers = #tpu.dot_dimension_numbers<[1], [0], [0], [1], [0, 0, 1, 1], [], []>} : vector<2x32xbf16>, vector<32x64xbf16>, vector<2x64xf32> -> vector<2x64xf32>
    %40 = arith.truncf %36 : vector<2x6xf32> to vector<2x6xbf16>
    %c0_22 = arith.constant 0 : index
    %c0_23 = arith.constant 0 : index
    %41 = vector.load %arg8[%c0_22, %c0_23] : memref<6x64xbf16, #tpu.memory_space<vmem>>, vector<6x64xbf16>
    %cst_24 = arith.constant dense<0.000000e+00> : vector<2x64xf32>
    %42 = tpu.matmul %40, %41, %cst_24 {dimension_numbers = #tpu.dot_dimension_numbers<[1], [0], [0], [1], [0, 0, 1, 1], [], []>} : vector<2x6xbf16>, vector<6x64xbf16>, vector<2x64xf32> -> vector<2x64xf32>
    %43 = arith.addf %39, %42 : vector<2x64xf32>
    %44 = arith.truncf %19 : vector<2x8xf32> to vector<2x8xbf16>
    %c0_25 = arith.constant 0 : index
    %c0_26 = arith.constant 0 : index
    %45 = vector.load %arg9[%c0_25, %c0_26] : memref<8x64xbf16, #tpu.memory_space<vmem>>, vector<8x64xbf16>
    %cst_27 = arith.constant dense<0.000000e+00> : vector<2x64xf32>
    %46 = tpu.matmul %44, %45, %cst_27 {dimension_numbers = #tpu.dot_dimension_numbers<[1], [0], [0], [1], [0, 0, 1, 1], [], []>} : vector<2x8xbf16>, vector<8x64xbf16>, vector<2x64xf32> -> vector<2x64xf32>
    %47 = arith.addf %43, %46 : vector<2x64xf32>
    %c0_28 = arith.constant 0 : index
    %c0_29 = arith.constant 0 : index
    %48 = vector.load %arg10[%c0_28, %c0_29] : memref<1x64xf32, #tpu.memory_space<vmem>>, vector<1x64xf32>
    %49 = vector.broadcast %48 : vector<1x64xf32> to vector<2x64xf32>
    %50 = arith.addf %47, %49 : vector<2x64xf32>
    %51 = math.tanh %50 : vector<2x64xf32>
    %c0_30 = arith.constant 0 : index
    %c0_31 = arith.constant 0 : index
    %52 = vector.load %arg11[%c0_30, %c0_31] : memref<2x64xf32, #tpu.memory_space<vmem>>, vector<2x64xf32>
    tpu.vector_store %arg11[%c0_30, %c0_31], %51 {strides = array<i32>} : memref<2x64xf32, #tpu.memory_space<vmem>>, vector<2x64xf32>,
    return
  }
  func.func @transform_0(%arg0: i32) -> (i32, i32, i32) {
    %c0_i32 = arith.constant 0 : i32
    %c0_i32_0 = arith.constant 0 : i32
    %c0_i32_1 = arith.constant 0 : i32
    %c0_i32_2 = arith.constant 0 : i32
    return %c0_i32, %c0_i32_0, %c0_i32_1 : i32, i32, i32
  }
  func.func @transform_1(%arg0: i32) -> (i32, i32) {
    %c0_i32 = arith.constant 0 : i32
    %c0_i32_0 = arith.constant 0 : i32
    %c0_i32_1 = arith.constant 0 : i32
    return %c0_i32, %c0_i32_0 : i32, i32
  }
  func.func @transform_2(%arg0: i32) -> (i32, i32) {
    %c0_i32 = arith.constant 0 : i32
    %c0_i32_0 = arith.constant 0 : i32
    %c0_i32_1 = arith.constant 0 : i32
    return %c0_i32, %c0_i32_0 : i32, i32
  }
  func.func @transform_3(%arg0: i32) -> (i32, i32) {
    %c0_i32 = arith.constant 0 : i32
    %c0_i32_0 = arith.constant 0 : i32
    %c0_i32_1 = arith.constant 0 : i32
    return %c0_i32, %c0_i32_0 : i32, i32
  }
  func.func @transform_4(%arg0: i32) -> (i32, i32) {
    %c0_i32 = arith.constant 0 : i32
    %c0_i32_0 = arith.constant 0 : i32
    %c0_i32_1 = arith.constant 0 : i32
    return %c0_i32, %c0_i32_0 : i32, i32
  }
  func.func @transform_5(%arg0: i32) -> (i32, i32) {
    %c0_i32 = arith.constant 0 : i32
    %c0_i32_0 = arith.constant 0 : i32
    %c0_i32_1 = arith.constant 0 : i32
    return %c0_i32, %c0_i32_0 : i32, i32
  }
  func.func @transform_6(%arg0: i32) -> (i32, i32) {
    %c0_i32 = arith.constant 0 : i32
    %c0_i32_0 = arith.constant 0 : i32
    %c0_i32_1 = arith.constant 0 : i32
    return %c0_i32, %c0_i32_0 : i32, i32
  }
  func.func @transform_7(%arg0: i32) -> (i32, i32) {
    %c0_i32 = arith.constant 0 : i32
    %c0_i32_0 = arith.constant 0 : i32
    %c0_i32_1 = arith.constant 0 : i32
    return %c0_i32, %c0_i32_0 : i32, i32
  }
  func.func @transform_8(%arg0: i32) -> (i32, i32) {
    %c0_i32 = arith.constant 0 : i32
    %c0_i32_0 = arith.constant 0 : i32
    %c0_i32_1 = arith.constant 0 : i32
    return %c0_i32, %c0_i32_0 : i32, i32
  }
  func.func @transform_9(%arg0: i32) -> (i32, i32) {
    %c0_i32 = arith.constant 0 : i32
    %c0_i32_0 = arith.constant 0 : i32
    %c0_i32_1 = arith.constant 0 : i32
    return %c0_i32, %c0_i32_0 : i32, i32
  }
  func.func @transform_10(%arg0: i32) -> (i32, i32) {
    %c0_i32 = arith.constant 0 : i32
    %c0_i32_0 = arith.constant 0 : i32
    %c0_i32_1 = arith.constant 0 : i32
    return %c0_i32, %c0_i32_0 : i32, i32
  }
}

</mosaic_0001>

<llo_original>
// kernel: tpu_custom_call.1
$region0: #{tpu_custom_call.1}
  #allocation0 [shape = 'u32[]', space=smem, size = 0x4, offset = 0x4, fixed_abs, tag = 'smem constant byte address 0x4 - core index']
  #allocation1 [shape = 'u32[72,128]{1,0:T(1,128)}', space=vmem, size = 0x9000, scoped, tag = 'internal scratch']
  %s0 = inlined_call_operand.vmem [shape: f32[2,4,256], index: 0, kind: input, shape index: {}]
  %s1 = inlined_call_operand.hbm [shape: f32[2,32], index: 1, kind: input, shape index: {}]
  %s2 = inlined_call_operand.hbm [shape: bf16[4,8], index: 2, kind: input, shape index: {}]
  %s3 = inlined_call_operand.hbm [shape: f32[1,8], index: 3, kind: input, shape index: {}]
  %s4 = inlined_call_operand.vmem [shape: bf16[32,6], index: 4, kind: input, shape index: {}]
  %s5 = inlined_call_operand.hbm [shape: f32[1,6], index: 5, kind: input, shape index: {}]
  %s6 = inlined_call_operand.hbm [shape: bf16[32,64], index: 6, kind: input, shape index: {}]
  %s7 = inlined_call_operand.vmem [shape: bf16[6,64], index: 7, kind: input, shape index: {}]
  %s8 = inlined_call_operand.vmem [shape: bf16[8,64], index: 8, kind: input, shape index: {}]
  %s9 = inlined_call_operand.vmem [shape: f32[1,64], index: 9, kind: input, shape index: {}]
  %s10 = inlined_call_operand.hbm [shape: f32[2,64], index: 10, kind: output, shape index: {}]
  %s11 = sld [smem:[#allocation0]]
  $region70: #{tpu_custom_call.1} parent=0
    _
  %s13 = ssub.s32 1, %s11
  %s14 = scalar_select 0, %s13, %s11
  $region1: #{tpu_custom_call.1} parent=0
    #allocation2 [shape = 'u8[1024]{0}', space=vmem, size = 0x400, scoped, tag = 'input window, operand 1, single buffered']
    #allocation3 [shape = 's32[1]{0}', space=sflag, size = 0x4, scoped, tag = 'scoped memory for tpu_custom_call.1']
    #allocation4 [shape = 's32[1]{0}', space=sflag, size = 0x4, scoped, tag = 'scoped memory for tpu_custom_call.1']
    #allocation5 [shape = 'u8[1024]{0}', space=vmem, size = 0x400, scoped, tag = 'input window, operand 2, single buffered']
    #allocation6 [shape = 's32[1]{0}', space=sflag, size = 0x4, scoped, tag = 'scoped memory for tpu_custom_call.1']
    #allocation7 [shape = 'u8[512]{0}', space=vmem, size = 0x400, scoped, tag = 'input window, operand 3, single buffered']
    #allocation8 [shape = 'u8[512]{0}', space=vmem, size = 0x400, scoped, tag = 'input window, operand 5, single buffered']
    #allocation9 [shape = 's32[1]{0}', space=sflag, size = 0x4, scoped, tag = 'scoped memory for tpu_custom_call.1']
    #allocation10 [shape = 'u8[8192]{0}', space=vmem, size = 0x2000, scoped, tag = 'input window, operand 6, single buffered']
    #allocation11 [shape = 'u8[1024]{0}', space=vmem, size = 0x400, scoped, tag = 'output window, operand 0, single buffered']
    %15 = vsyncpa [#allocation3], 0
    %16 = vsyncpa [#allocation6], 0
    %17 = vsyncpa [#allocation9], 0
    %18 = vsyncpa [#allocation4], 0
    // Predicated region
    $region2: #{tpu_custom_call.1} parent=1 // pred_check
      _
    $region3: #{tpu_custom_call.1} parent=1 // pred_check_branch
      %20 = sbr.rel (0) target = $region5
    $region4: #{tpu_custom_call.1} parent=1 // pred_region
      _
    $region5: #{tpu_custom_call.1} parent=1 // pred_fallthru
      _
    // Predicated region
    $region6: #{tpu_custom_call.1} parent=1 // pred_check
      _
    $region7: #{tpu_custom_call.1} parent=1 // pred_check_branch
      %22 = sbr.rel (0) target = $region9
    $region8: #{tpu_custom_call.1} parent=1 // pred_region
      %24 = vsyncadd [#allocation3], 0
      %s26 = sshll.u32 %s1, 4
      %s27 = int_to_ptr.hbm [resolvable:$true] %s26
      %s28 = sshll.u32 [#allocation2], 4
      %s29 = int_to_ptr.vmem [resolvable:$true] %s28
      %31 = dma.hbm_to_vmem [thread:$0]  %s27, 32, %s29, [#allocation3]
    $region9: #{tpu_custom_call.1} parent=1 // pred_fallthru
      _
    // Predicated region
    $region10: #{tpu_custom_call.1} parent=1 // pred_check
      _
    $region11: #{tpu_custom_call.1} parent=1 // pred_check_branch
      %33 = sbr.rel (0) target = $region13
    $region12: #{tpu_custom_call.1} parent=1 // pred_region
      %35 = vsyncadd [#allocation6], 0
      %s37 = sshll.u32 %s2, 4
      %s38 = int_to_ptr.hbm [resolvable:$true] %s37
      %s39 = sshll.u32 [#allocation5], 4
      %s40 = int_to_ptr.vmem [resolvable:$true] %s39
      %42 = dma.hbm_to_vmem [thread:$0]  %s38, 32, %s40, [#allocation6]
    $region13: #{tpu_custom_call.1} parent=1 // pred_fallthru
      _
    // Predicated region
    $region14: #{tpu_custom_call.1} parent=1 // pred_check
      _
    $region15: #{tpu_custom_call.1} parent=1 // pred_check_branch
      %44 = sbr.rel (0) target = $region17
    $region16: #{tpu_custom_call.1} parent=1 // pred_region
      %46 = vsyncadd [#allocation6], 0
      %s48 = sshll.u32 %s3, 4
      %s49 = int_to_ptr.hbm [resolvable:$true] %s48
      %s50 = sshll.u32 [#allocation7], 4
      %s51 = int_to_ptr.vmem [resolvable:$true] %s50
      %53 = dma.hbm_to_vmem [thread:$0]  %s49, 16, %s51, [#allocation6]
    $region17: #{tpu_custom_call.1} parent=1 // pred_fallthru
      _
    // Predicated region
    $region18: #{tpu_custom_call.1} parent=1 // pred_check
      _
    $region19: #{tpu_custom_call.1} parent=1 // pred_check_branch
      %55 = sbr.rel (0) target = $region21
    $region20: #{tpu_custom_call.1} parent=1 // pred_region
      _
    $region21: #{tpu_custom_call.1} parent=1 // pred_fallthru
      _
    // Predicated region
    $region22: #{tpu_custom_call.1} parent=1 // pred_check
      _
    $region23: #{tpu_custom_call.1} parent=1 // pred_check_branch
      %57 = sbr.rel (0) target = $region25
    $region24: #{tpu_custom_call.1} parent=1 // pred_region
      %59 = vsyncadd [#allocation9], 0
      %s61 = sshll.u32 %s5, 4
      %s62 = int_to_ptr.hbm [resolvable:$true] %s61
      %s63 = sshll.u32 [#allocation8], 4
      %s64 = int_to_ptr.vmem [resolvable:$true] %s63
      %66 = dma.hbm_to_vmem [thread:$0]  %s62, 16, %s64, [#allocation9]
    $region25: #{tpu_custom_call.1} parent=1 // pred_fallthru
      _
    // Predicated region
    $region26: #{tpu_custom_call.1} parent=1 // pred_check
      _
    $region27: #{tpu_custom_call.1} parent=1 // pred_check_branch
      %68 = sbr.rel (0) target = $region29
    $region28: #{tpu_custom_call.1} parent=1 // pred_region
      %70 = vsyncadd [#allocation9], 0
      %s71 = sshll.u32 %s6, 4
      %s72 = int_to_ptr.hbm [resolvable:$true] %s71
      %s73 = sshll.u32 [#allocation10], 4
      %s74 = int_to_ptr.vmem [resolvable:$true] %s73
      %79 = dma.hbm_to_vmem [thread:$0]  %s72, 256, %s74, [#allocation9], 64, 64, 4
    $region29: #{tpu_custom_call.1} parent=1 // pred_fallthru
      _
    // Predicated region
    $region30: #{tpu_custom_call.1} parent=1 // pred_check
      _
    $region31: #{tpu_custom_call.1} parent=1 // pred_check_branch
      %81 = sbr.rel (0) target = $region33
    $region32: #{tpu_custom_call.1} parent=1 // pred_region
      _
    $region33: #{tpu_custom_call.1} parent=1 // pred_fallthru
      _
    // Predicated region
    $region34: #{tpu_custom_call.1} parent=1 // pred_check
      _
    $region35: #{tpu_custom_call.1} parent=1 // pred_check_branch
      %83 = sbr.rel (0) target = $region37
    $region36: #{tpu_custom_call.1} parent=1 // pred_region
      _
    $region37: #{tpu_custom_call.1} parent=1 // pred_fallthru
      _
    // Predicated region
    $region38: #{tpu_custom_call.1} parent=1 // pred_check
      _
    $region39: #{tpu_custom_call.1} parent=1 // pred_check_branch
      %85 = sbr.rel (0) target = $region41
    $region40: #{tpu_custom_call.1} parent=1 // pred_region
      _
    $region41: #{tpu_custom_call.1} parent=1 // pred_fallthru
      _
    // Predicated region
    $region42: #{tpu_custom_call.1} parent=1 // pred_check
      _
    $region43: #{tpu_custom_call.1} parent=1 // pred_check_branch
      %87 = sbr.rel (0) target = $region45
    $region44: #{tpu_custom_call.1} parent=1 // pred_region
      %89 = dma.done [#allocation3], 32
    $region45: #{tpu_custom_call.1} parent=1 // pred_fallthru
      _
    // Predicated region
    $region46: #{tpu_custom_call.1} parent=1 // pred_check
      _
    $region47: #{tpu_custom_call.1} parent=1 // pred_check_branch
      %91 = sbr.rel (0) target = $region49
    $region48: #{tpu_custom_call.1} parent=1 // pred_region
      %93 = dma.done [#allocation6], 32
    $region49: #{tpu_custom_call.1} parent=1 // pred_fallthru
      _
    // Predicated region
    $region50: #{tpu_custom_call.1} parent=1 // pred_check
      _
    $region51: #{tpu_custom_call.1} parent=1 // pred_check_branch
      %95 = sbr.rel (0) target = $region53
    $region52: #{tpu_custom_call.1} parent=1 // pred_region
      %97 = dma.done [#allocation6], 16
    $region53: #{tpu_custom_call.1} parent=1 // pred_fallthru
      _
    // Predicated region
    $region54: #{tpu_custom_call.1} parent=1 // pred_check
      _
    $region55: #{tpu_custom_call.1} parent=1 // pred_check_branch
      %99 = sbr.rel (0) target = $region57
    $region56: #{tpu_custom_call.1} parent=1 // pred_region
      %101 = dma.done [#allocation9], 16
    $region57: #{tpu_custom_call.1} parent=1 // pred_fallthru
      _
    // Predicated region
    $region58: #{tpu_custom_call.1} parent=1 // pred_check
      _
    $region59: #{tpu_custom_call.1} parent=1 // pred_check_branch
      %103 = sbr.rel (0) target = $region61
    $region60: #{tpu_custom_call.1} parent=1 // pred_region
      %105 = dma.done [#allocation9], 256
    $region61: #{tpu_custom_call.1} parent=1 // pred_fallthru
      _
    %v107 = vld [vmem:[%s0] sm:$0xff]
    %v108 = vld [vmem:[%s0 + $0x8] sm:$0xff]
    %111 = vst [vmem:[#allocation1] ss:$2 sm:$0xff] %v107
    %v112 = vld.sshfl [vmem:[#allocation1] sm:$0xff pattern:$0x75316420]
    %v113 = vld.sshfl [vmem:[#allocation1 + $0x8] sm:$0xff pattern:$0x75316420]
    %s114 = scalar_lea.vmem [#allocation1], 16
    %115 = vst [vmem:[%s114] ss:$2 sm:$0xff] %v108
    %v116 = vld.sshfl [vmem:[#allocation1 + $0x10] sm:$0xff pattern:$0x75316420]
    %v117 = vld.sshfl [vmem:[#allocation1 + $0x18] sm:$0xff pattern:$0x75316420]
    %vm122 = vcmask 1043456
    %v123 = vsel %vm122, %v112, 0.0
    %v124 = vsel %vm122, %v113, 0.0
    %v125 = vadd.f32 %v123, %v124
    %126 = vadd.xlane.f32.xlu0 %v125
    %v127 = vpop.xlane.xlu0 %126
    %v128 = vsel %vm122, %v116, 0.0
    %v129 = vsel %vm122, %v117, 0.0
    %v130 = vadd.f32 %v128, %v129
    %131 = vadd.xlane.f32.xlu0 %v130
    %v132 = vpop.xlane.xlu0 %131
    %v133 = vrcp.pop 256.0
    %v134 = vmul.f32 256.0, %v133
    %v135 = vsub.f32 1.0, %v134
    %v136 = vmul.f32 %v133, %v135
    %v137 = vadd.f32 %v133, %v136
    %vm138 = vweird.f32 %v133
    %v139 = vsel %vm138, %v133, %v137
    %v140 = vmul.f32 %v127, %v139
    %v141 = vmul.f32 %v132, %v139
    %v142 = vpack.c.bf16 %v140, %v140
    %v143 = vpack.c.bf16 %v141, %v141
    %v144 = vld [vmem:[#allocation5] sm:$0x3]
    %v145 = vld [vmem:[#allocation7] sm:$0x1]
    %v147 = vperm.slane %v145, 0
    %v151 = vunpack.c.l.b16 %v142
    %v152 = vunpack.c.l.b16 %v143
    %v153 = vlaneseq
    %v154 = vand.u32 %v153, 127
    %v155 = vperm.slane %v151, %v154
    %v156 = vperm.slane %v152, %v154
    %vm157 = vcmask 1041409
    %v158 = vsel %vm157, %v156, %v155
    %v159 = vpack.c.b16 %v158, %v158
    %vm160 = vcmask 31744
    %v162 = vsel %vm160, %v159, 0
    %vm164 = vcmask 1041408
    %v166 = vsel %vm164, %v144, 0
    %168 = vmatpush.bf16.msra.mxu0 0
    %169 = vmatpush.bf16.msra.mxu0 0
    %170 = vmatpush.bf16.msra.mxu0 0
    %171 = vmatpush.bf16.msra.mxu0 0
    %172 = vmatpush.bf16.msra.mxu0 0
    %173 = vmatpush.bf16.msra.mxu0 0
    %174 = vmatpush.bf16.msra.mxu0 0
    %175 = vmatpush.bf16.msra.mxu0 %v166
    %176 = vmatmul.bf16.gmra.mxu0 %v162
    %v177 = vpop.f32.mrf.mxu0
    %v178 = vadd.f32 %v147, %v177
    %v179 = vpop.f32.mrf.mxu0
    %180 = vdwg.mxu0
    %vm181 = vcmask 58368
    %v182 = vsel %vm181, %v178, -inf
    %183 = vmax.xlane.f32.xlu0 %v182
    %v184 = vpop.xlane.xlu0 %183
    %v185 = vsub.f32 %v178, %v184
    %v186 = vmul.f32 %v185, 1.442695
    %v187 = vpow.pop %v186
    %v188 = vsel %vm181, %v187, 0.0
    %189 = vadd.xlane.f32.xlu0 %v188
    %v190 = vpop.xlane.xlu0 %189
    %v191 = vlog2.pop %v190
    %v192 = vmul.f32 %v191, 0.6931472
    %v193 = vsub.f32 %v185, %v192
    %v194 = vld [vmem:[#allocation2] sm:$0x3]
    %v195 = vpack.c.bf16 %v194, %v194
    %v196 = vld [vmem:[%s4] sm:$0xf]
    %v197 = vld [vmem:[%s4 + $0x4] sm:$0xf]
    %v198 = vld [vmem:[%s4 + $0x8] sm:$0xf]
    %v199 = vld [vmem:[%s4 + $0xc] sm:$0xf]
    %v200 = vld [vmem:[#allocation8] sm:$0x1]
    %v202 = vperm.slane %v200, 0
    %v208 = vunpack.c.l.b16 %v196
    %v209 = vunpack.c.l.b16 %v197
    %v210 = vunpack.c.l.b16 %v198
    %v211 = vunpack.c.l.b16 %v199
    %v212 = vpack.c.b16 %v209, %v208
    %v213 = vpack.c.b16 %v211, %v210
    %vm216 = vcmask 261120
    %v218 = vsel %vm216, %v195, 0
    %220 = vmatpush.bf16.msra.mxu0 0
    %221 = vmatpush.bf16.msra.mxu0 0
    %222 = vmatpush.bf16.msra.mxu0 0
    %223 = vmatpush.bf16.msra.mxu0 0
    %224 = vmatpush.bf16.msra.mxu0 0
    %225 = vmatpush.bf16.msra.mxu0 0
    %226 = vmatpush.bf16.msra.mxu0 %v213
    %227 = vmatpush.bf16.msra.mxu0 %v212
    %228 = vmatmul.bf16.gmra.mxu0 %v218
    %v229 = vpop.f32.mrf.mxu0
    %v230 = vadd.f32 %v202, %v229
    %v231 = vpop.f32.mrf.mxu0
    %232 = vdwg.mxu0
    %vm233 = vcmask 41984
    %v234 = vsel %vm233, %v230, -inf
    %235 = vmax.xlane.f32.xlu0 %v234
    %v236 = vpop.xlane.xlu0 %235
    %v237 = vsub.f32 %v230, %v236
    %v238 = vmul.f32 %v237, 1.442695
    %v239 = vpow.pop %v238
    %v240 = vsel %vm233, %v239, 0.0
    %241 = vadd.xlane.f32.xlu0 %v240
    %v242 = vpop.xlane.xlu0 %241
    %v243 = vlog2.pop %v242
    %v244 = vmul.f32 %v243, 0.6931472
    %v245 = vsub.f32 %v237, %v244
    %v246 = vld [vmem:[#allocation10] sm:$0xf]
    %v247 = vld [vmem:[#allocation10 + $0x4] sm:$0xf]
    %v248 = vld [vmem:[#allocation10 + $0x8] sm:$0xf]
    %v249 = vld [vmem:[#allocation10 + $0xc] sm:$0xf]
    %v250 = vpack.c.bf16 %v245, %v245
    %v251 = vld [vmem:[%s7] sm:$0x7]
    %vm252 = vcmask 48128
    %v254 = vsel %vm252, %v250, 0
    %vm256 = vcmask 1042432
    %v258 = vsel %vm256, %v251, 0
    %260 = vmatpush.bf16.msra.mxu0 0
    %261 = vmatpush.bf16.msra.mxu0 0
    %262 = vmatpush.bf16.msra.mxu0 0
    %263 = vmatpush.bf16.msra.mxu0 0
    %264 = vmatpush.bf16.msra.mxu0 0
    %265 = vmatpush.bf16.msra.mxu0 0
    %266 = vmatpush.bf16.msra.mxu0 0
    %267 = vmatpush.bf16.msra.mxu0 %v258
    %268 = vmatmul.bf16.gmra.mxu0 %v254
    %v269 = vpop.f32.mrf.mxu0
    %v270 = vadd.f32 0.0, %v269
    %v271 = vpop.f32.mrf.mxu0
    %272 = vdwg.mxu0
    %v277 = vunpack.c.l.b16 %v246
    %v278 = vunpack.c.l.b16 %v247
    %v279 = vunpack.c.l.b16 %v248
    %v280 = vunpack.c.l.b16 %v249
    %v281 = vpack.c.b16 %v278, %v277
    %v282 = vpack.c.b16 %v280, %v279
    %285 = vmatpush.bf16.msra.mxu0 0
    %286 = vmatpush.bf16.msra.mxu0 0
    %287 = vmatpush.bf16.msra.mxu0 0
    %288 = vmatpush.bf16.msra.mxu0 0
    %289 = vmatpush.bf16.msra.mxu0 0
    %290 = vmatpush.bf16.msra.mxu0 0
    %291 = vmatpush.bf16.msra.mxu0 %v282
    %292 = vmatpush.bf16.msra.mxu0 %v281
    %293 = vmatmul.bf16.gmra.mxu0 %v218
    %v294 = vpop.f32.mrf.mxu0
    %v295 = vadd.f32 %v270, %v294
    %v296 = vpop.f32.mrf.mxu0
    %297 = vdwg.mxu0
    %v298 = vpack.c.bf16 %v193, %v193
    %v299 = vld [vmem:[%s8] sm:$0xf]
    %vm300 = vcmask 64512
    %v302 = vsel %vm300, %v298, 0
    %v305 = vsel %vm122, %v299, 0
    %307 = vmatpush.bf16.msra.mxu0 0
    %308 = vmatpush.bf16.msra.mxu0 0
    %309 = vmatpush.bf16.msra.mxu0 0
    %310 = vmatpush.bf16.msra.mxu0 0
    %311 = vmatpush.bf16.msra.mxu0 0
    %312 = vmatpush.bf16.msra.mxu0 0
    %313 = vmatpush.bf16.msra.mxu0 0
    %314 = vmatpush.bf16.msra.mxu0 %v305
    %315 = vmatmul.bf16.gmra.mxu0 %v302
    %v316 = vpop.f32.mrf.mxu0
    %v317 = vadd.f32 0.0, %v316
    %v318 = vpop.f32.mrf.mxu0
    %319 = vdwg.mxu0
    %v320 = vadd.f32 %v295, %v317
    %v321 = vld [vmem:[%s9] sm:$0x1]
    %v323 = vperm.slane %v321, 0
    %v325 = vadd.f32 %v320, %v323
    %v326 = vtanh.pop %v325
    %vm327 = vcmask 517120
    %328 = vst.msk [vmem:[#allocation11] sm:$0x3] %vm327, %v326
    // Predicated region
    $region62: #{tpu_custom_call.1} parent=1 // pred_check
      _
    $region63: #{tpu_custom_call.1} parent=1 // pred_check_branch
      %330 = sbr.rel (0) target = $region65
    $region64: #{tpu_custom_call.1} parent=1 // pred_region
      %332 = vsyncadd [#allocation4], 0
      %s334 = sshll.u32 [#allocation11], 4
      %s335 = int_to_ptr.vmem [resolvable:$true] %s334
      %s336 = sshll.u32 %s10, 4
      %s337 = int_to_ptr.hbm [resolvable:$true] %s336
      %339 = dma.vmem_to_hbm [thread:$0]  %s335, 32, %s337, [#allocation4]
    $region65: #{tpu_custom_call.1} parent=1 // pred_fallthru
      _
    // Predicated region
    $region66: #{tpu_custom_call.1} parent=1 // pred_check
      _
    $region67: #{tpu_custom_call.1} parent=1 // pred_check_branch
      %341 = sbr.rel (0) target = $region69
    $region68: #{tpu_custom_call.1} parent=1 // pred_region
      %343 = dma.done [#allocation4], 32
    $region69: #{tpu_custom_call.1} parent=1 // pred_fallthru
      _
    %344 = vsyncpa [#allocation3], 1
    %345 = vsyncpa [#allocation6], 1
    %346 = vsyncpa [#allocation9], 1
    %347 = vsyncpa [#allocation4], 1

</llo_original>
